<compile_context>
chip_gen: v6e
topology: v6e:2x2x1
jax: 0.10.0
libtpu: 0.0.40
codegen_flags: <defaults>
</compile_context>

<pallas_src>
import jax
import jax.numpy as jnp
from jax.experimental import pallas as pl
from jax.experimental.pallas import tpu as pltpu

INPUT_SIZE = 768
HIDDEN1 = 256
HIDDEN2 = 128
NUM_CLASSES = 36
NUM_CLASSES_PAD = 128   # lane-dense output width (multiple of 128)

MAX_BLOCK_B = 1024      # batch tile cap (few MiB of VMEM, far under scoped limits)
SUBLANE_PACK = 16       # bf16 sublane packing


def mlp_kernel(x_ref, w1_ref, b1_ref, w2_ref, b2_ref, w3_ref, b3_ref, o_ref):
    # fc1 + ReLU: cast x to bf16 in-register (VALU has slack; avoids a wrapper
    # side HBM re-pass over x), accumulate in f32 on the MXU.
    x = x_ref[...].astype(jnp.bfloat16)
    h1 = jnp.dot(x, w1_ref[...], preferred_element_type=jnp.float32)
    h1 = jnp.maximum(h1 + b1_ref[...], 0.0)
    # dropout -> identity (eval mode)
    h2 = jnp.dot(h1.astype(jnp.bfloat16), w2_ref[...],
                 preferred_element_type=jnp.float32)
    h2 = jnp.maximum(h2 + b2_ref[...], 0.0)
    # dropout -> identity (eval mode)
    # fc3 logits, padded to 128 lanes (columns 36..127 are exact zeros).
    out = jnp.dot(h2.astype(jnp.bfloat16), w3_ref[...],
                  preferred_element_type=jnp.float32)
    o_ref[...] = (out + b3_ref[...]).astype(o_ref.dtype)   # bf16 lane-dense store


def _cdiv(a, b):
    return -(-a // b)


def _round_up(n, m):
    return ((n + m - 1) // m) * m


def _pick_block_b(batch):
    """Pick (block_b, padded_batch).

    block_b is a multiple of 16 (bf16 sublane packing) and as large as possible
    (<= MAX_BLOCK_B) to amortize per-step pipeline overhead; the grid length is
    kept even (>= 2) whenever batch > 16 so v7x shards the parallel axis across
    both TensorCores with minimal padding.
    """
    if batch <= SUBLANE_PACK:
        return SUBLANE_PACK, SUBLANE_PACK          # single tiny tile
    n_steps = max(2, _round_up(_cdiv(batch, MAX_BLOCK_B), 2))
    block_b = _round_up(_cdiv(batch, n_steps), SUBLANE_PACK)
    return block_b, n_steps * block_b


def prepare_params(w1, b1, w2, b2, w3, b3):
    """One-time parameter prep, hoisted out of the per-call forward.

    Weights are expected as (in_features, out_features).  Returns bf16 matmul
    operands, f32 biases shaped (1, out), and fc3/b3 zero-padded to 128 lanes.
    """
    w1b = w1.astype(jnp.bfloat16)
    w2b = w2.astype(jnp.bfloat16)
    w3b = jnp.zeros((HIDDEN2, NUM_CLASSES_PAD), jnp.bfloat16).at[
        :, :NUM_CLASSES].set(w3.astype(jnp.bfloat16))
    b1f = b1.reshape(1, HIDDEN1).astype(jnp.float32)
    b2f = b2.reshape(1, HIDDEN2).astype(jnp.float32)
    b3f = jnp.zeros((1, NUM_CLASSES_PAD), jnp.float32).at[
        :, :NUM_CLASSES].set(b3.reshape(1, NUM_CLASSES).astype(jnp.float32))
    return w1b, b1f, w2b, b2f, w3b, b3f


@jax.jit
def simple_nn_forward(x, w1b, b1f, w2b, b2f, w3b, b3f):
    B = x.shape[0]
    block_b, B_pad = _pick_block_b(B)
    grid = (B_pad // block_b,)

    if B_pad != B:
        # Only when the batch doesn't tile evenly: build one padded copy, and
        # fold the bf16 cast into that same pass to halve the kernel re-read.
        x_in = jnp.zeros((B_pad, INPUT_SIZE), jnp.bfloat16).at[:B].set(
            x.astype(jnp.bfloat16))
    else:
        # No extra HBM pass: stream x as-is (f32 or bf16); kernel casts on VPU.
        x_in = x

    # Weights/biases: block_shape == full array dims and a constant index_map
    # -> DMA'd once, VMEM-resident across all grid steps.
    full = lambda shape: pl.BlockSpec(shape, lambda i: (0,) * len(shape))

    out_padded = pl.pallas_call(
        mlp_kernel,
        out_shape=jax.ShapeDtypeStruct((B_pad, NUM_CLASSES_PAD), jnp.bfloat16),
        grid_spec=pltpu.PrefetchScalarGridSpec(
            num_scalar_prefetch=0,
            grid=grid,
            in_specs=[
                pl.BlockSpec((block_b, INPUT_SIZE), lambda i: (i, 0)),  # x
                full((INPUT_SIZE, HIDDEN1)),                            # w1
                full((1, HIDDEN1)),                                     # b1
                full((HIDDEN1, HIDDEN2)),                               # w2
                full((1, HIDDEN2)),                                     # b2
                full((HIDDEN2, NUM_CLASSES_PAD)),                       # w3 (padded)
                full((1, NUM_CLASSES_PAD)),                             # b3 (padded)
            ],
            out_specs=pl.BlockSpec((block_b, NUM_CLASSES_PAD), lambda i: (i, 0)),
        ),
        compiler_params=pltpu.CompilerParams(
            dimension_semantics=("parallel",),
        ),
    )(x_in, w1b, b1f, w2b, b2f, w3b, b3f)

    # Layout plumbing only: drop batch/lane padding, restore f32 logits to
    # match the PyTorch module's output dtype.
    return out_padded[:B, :NUM_CLASSES].astype(jnp.float32)


def init_params(key):
    """Deterministic param init mirroring nn.Linear (weights stored as (in, out))."""
    ks = jax.random.split(key, 6)

    def linear(kw, kb, fan_in, fan_out):
        bound = 1.0 / jnp.sqrt(fan_in)
        w = jax.random.uniform(kw, (fan_in, fan_out), jnp.float32, -bound, bound)
        b = jax.random.uniform(kb, (fan_out,), jnp.float32, -bound, bound)
        return w, b

    w1, b1 = linear(ks[0], ks[1], INPUT_SIZE, HIDDEN1)
    w2, b2 = linear(ks[2], ks[3], HIDDEN1, HIDDEN2)
    w3, b3 = linear(ks[4], ks[5], HIDDEN2, NUM_CLASSES)
    return w1, b1, w2, b2, w3, b3


def reference_forward(x, w1, b1, w2, b2, w3, b3):
    # Mirrors the kernel's bf16 quantization of x / weights / activations / logits.
    f32 = jnp.float32
    xb = x.astype(jnp.bfloat16).astype(f32)
    w1f = w1.astype(jnp.bfloat16).astype(f32)
    w2f = w2.astype(jnp.bfloat16).astype(f32)
    w3f = w3.astype(jnp.bfloat16).astype(f32)
    h1 = jnp.maximum(xb @ w1f + b1.reshape(1, -1), 0.0)
    h1 = h1.astype(jnp.bfloat16).astype(f32)
    h2 = jnp.maximum(h1 @ w2f + b2.reshape(1, -1), 0.0)
    h2 = h2.astype(jnp.bfloat16).astype(f32)
    out = h2 @ w3f + b3.reshape(1, -1)
    return out.astype(jnp.bfloat16).astype(f32)


if __name__ == "__main__":
    key = jax.random.PRNGKey(0)
    k_x, k_p = jax.random.split(key)

    params = init_params(k_p)
    kparams = prepare_params(*params)   # one-time prep, outside the hot path

    # Small batch: exercises the padding path (single 16-row tile).
    x_small = jax.random.normal(k_x, (4, INPUT_SIZE), jnp.float32)
    out_small = simple_nn_forward(x_small, *kparams)
    jax.block_until_ready(out_small)
    assert out_small.shape == (4, NUM_CLASSES)
    ref_small = reference_forward(x_small, *params)
    assert jnp.allclose(out_small, ref_small, atol=2e-2, rtol=2e-2), \
        "small-batch mismatch vs reference"

    # Larger batch: no padding, grid of 2 (keeps both v7x TensorCores busy).
    x_big = jax.random.normal(k_x, (512, INPUT_SIZE), jnp.float32)
    out_big = simple_nn_forward(x_big, *kparams)
    jax.block_until_ready(out_big)
    assert out_big.shape == (512, NUM_CLASSES)
    ref_big = reference_forward(x_big, *params)
    assert jnp.allclose(out_big, ref_big, atol=2e-2, rtol=2e-2), \
        "large-batch mismatch vs reference"

    print("KERNEL_OK")
</pallas_src>

<mosaic_0001>
module attributes {stable_mosaic.version = 11 : i64} {
  func.func @mlp_kernel(%arg0: i32, %arg1: memref<16x768xbf16, #tpu.memory_space<vmem>>, %arg2: memref<768x256xbf16, #tpu.memory_space<vmem>>, %arg3: memref<1x256xf32, #tpu.memory_space<vmem>>, %arg4: memref<256x128xbf16, #tpu.memory_space<vmem>>, %arg5: memref<1x128xf32, #tpu.memory_space<vmem>>, %arg6: memref<128x128xbf16, #tpu.memory_space<vmem>>, %arg7: memref<1x128xf32, #tpu.memory_space<vmem>>, %arg8: memref<16x128xbf16, #tpu.memory_space<vmem>>) attributes {dimension_semantics = [#tpu.dimension_semantics<parallel>], iteration_bounds = array<i64: 1>, scalar_prefetch = 0 : i64, scratch_operands = 0 : i64, tpu.core_type = #tpu.core_type<tc>, window_params = [{transform_indices = @transform_0, window_bounds = array<i64: 16, 768>}, {pipeline_mode = #tpu.pipeline_mode<synchronous>, transform_indices = @transform_1, window_bounds = array<i64: 768, 256>}, {pipeline_mode = #tpu.pipeline_mode<synchronous>, transform_indices = @transform_2, window_bounds = array<i64: 1, 256>}, {pipeline_mode = #tpu.pipeline_mode<synchronous>, transform_indices = @transform_3, window_bounds = array<i64: 256, 128>}, {pipeline_mode = #tpu.pipeline_mode<synchronous>, transform_indices = @transform_4, window_bounds = array<i64: 1, 128>}, {pipeline_mode = #tpu.pipeline_mode<synchronous>, transform_indices = @transform_5, window_bounds = array<i64: 128, 128>}, {pipeline_mode = #tpu.pipeline_mode<synchronous>, transform_indices = @transform_6, window_bounds = array<i64: 1, 128>}, {transform_indices = @transform_7, window_bounds = array<i64: 16, 128>}]} {
    %c0 = arith.constant 0 : index
    %c0_0 = arith.constant 0 : index
    %0 = vector.load %arg1[%c0, %c0_0] : memref<16x768xbf16, #tpu.memory_space<vmem>>, vector<16x768xbf16>
    %c0_1 = arith.constant 0 : index
    %c0_2 = arith.constant 0 : index
    %1 = vector.load %arg2[%c0_1, %c0_2] : memref<768x256xbf16, #tpu.memory_space<vmem>>, vector<768x256xbf16>
    %cst = arith.constant dense<0.000000e+00> : vector<16x256xf32>
    %2 = tpu.matmul %0, %1, %cst {dimension_numbers = #tpu.dot_dimension_numbers<[1], [0], [0], [1], [0, 0, 1, 1], [], []>} : vector<16x768xbf16>, vector<768x256xbf16>, vector<16x256xf32> -> vector<16x256xf32>
    %c0_3 = arith.constant 0 : index
    %c0_4 = arith.constant 0 : index
    %3 = vector.load %arg3[%c0_3, %c0_4] : memref<1x256xf32, #tpu.memory_space<vmem>>, vector<1x256xf32>
    %4 = vector.broadcast %3 : vector<1x256xf32> to vector<16x256xf32>
    %5 = arith.addf %2, %4 : vector<16x256xf32>
    %cst_5 = arith.constant 0.000000e+00 : f32
    %6 = vector.broadcast %cst_5 : f32 to vector<16x256xf32>
    %7 = arith.maximumf %5, %6 : vector<16x256xf32>
    %8 = arith.truncf %7 : vector<16x256xf32> to vector<16x256xbf16>
    %c0_6 = arith.constant 0 : index
    %c0_7 = arith.constant 0 : index
    %9 = vector.load %arg4[%c0_6, %c0_7] : memref<256x128xbf16, #tpu.memory_space<vmem>>, vector<256x128xbf16>
    %cst_8 = arith.constant dense<0.000000e+00> : vector<16x128xf32>
    %10 = tpu.matmul %8, %9, %cst_8 {dimension_numbers = #tpu.dot_dimension_numbers<[1], [0], [0], [1], [0, 0, 1, 1], [], []>} : vector<16x256xbf16>, vector<256x128xbf16>, vector<16x128xf32> -> vector<16x128xf32>
    %c0_9 = arith.constant 0 : index
    %c0_10 = arith.constant 0 : index
    %11 = vector.load %arg5[%c0_9, %c0_10] : memref<1x128xf32, #tpu.memory_space<vmem>>, vector<1x128xf32>
    %12 = vector.broadcast %11 : vector<1x128xf32> to vector<16x128xf32>
    %13 = arith.addf %10, %12 : vector<16x128xf32>
    %cst_11 = arith.constant 0.000000e+00 : f32
    %14 = vector.broadcast %cst_11 : f32 to vector<16x128xf32>
    %15 = arith.maximumf %13, %14 : vector<16x128xf32>
    %16 = arith.truncf %15 : vector<16x128xf32> to vector<16x128xbf16>
    %c0_12 = arith.constant 0 : index
    %c0_13 = arith.constant 0 : index
    %17 = vector.load %arg6[%c0_12, %c0_13] : memref<128x128xbf16, #tpu.memory_space<vmem>>, vector<128x128xbf16>
    %cst_14 = arith.constant dense<0.000000e+00> : vector<16x128xf32>
    %18 = tpu.matmul %16, %17, %cst_14 {dimension_numbers = #tpu.dot_dimension_numbers<[1], [0], [0], [1], [0, 0, 1, 1], [], []>} : vector<16x128xbf16>, vector<128x128xbf16>, vector<16x128xf32> -> vector<16x128xf32>
    %c0_15 = arith.constant 0 : index
    %c0_16 = arith.constant 0 : index
    %19 = vector.load %arg7[%c0_15, %c0_16] : memref<1x128xf32, #tpu.memory_space<vmem>>, vector<1x128xf32>
    %20 = vector.broadcast %19 : vector<1x128xf32> to vector<16x128xf32>
    %21 = arith.addf %18, %20 : vector<16x128xf32>
    %22 = arith.truncf %21 : vector<16x128xf32> to vector<16x128xbf16>
    %c0_17 = arith.constant 0 : index
    %c0_18 = arith.constant 0 : index
    %23 = vector.load %arg8[%c0_17, %c0_18] : memref<16x128xbf16, #tpu.memory_space<vmem>>, vector<16x128xbf16>
    tpu.vector_store %arg8[%c0_17, %c0_18], %22 {strides = array<i32>} : memref<16x128xbf16, #tpu.memory_space<vmem>>, vector<16x128xbf16>,
    return
  }
  func.func @transform_0(%arg0: i32) -> (i32, i32) {
    %c0_i32 = arith.constant 0 : i32
    %c0_i32_0 = arith.constant 0 : i32
    return %arg0, %c0_i32 : i32, i32
  }
  func.func @transform_1(%arg0: i32) -> (i32, i32) {
    %c0_i32 = arith.constant 0 : i32
    %c0_i32_0 = arith.constant 0 : i32
    %c0_i32_1 = arith.constant 0 : i32
    return %c0_i32, %c0_i32_0 : i32, i32
  }
  func.func @transform_2(%arg0: i32) -> (i32, i32) {
    %c0_i32 = arith.constant 0 : i32
    %c0_i32_0 = arith.constant 0 : i32
    %c0_i32_1 = arith.constant 0 : i32
    return %c0_i32, %c0_i32_0 : i32, i32
  }
  func.func @transform_3(%arg0: i32) -> (i32, i32) {
    %c0_i32 = arith.constant 0 : i32
    %c0_i32_0 = arith.constant 0 : i32
    %c0_i32_1 = arith.constant 0 : i32
    return %c0_i32, %c0_i32_0 : i32, i32
  }
  func.func @transform_4(%arg0: i32) -> (i32, i32) {
    %c0_i32 = arith.constant 0 : i32
    %c0_i32_0 = arith.constant 0 : i32
    %c0_i32_1 = arith.constant 0 : i32
    return %c0_i32, %c0_i32_0 : i32, i32
  }
  func.func @transform_5(%arg0: i32) -> (i32, i32) {
    %c0_i32 = arith.constant 0 : i32
    %c0_i32_0 = arith.constant 0 : i32
    %c0_i32_1 = arith.constant 0 : i32
    return %c0_i32, %c0_i32_0 : i32, i32
  }
  func.func @transform_6(%arg0: i32) -> (i32, i32) {
    %c0_i32 = arith.constant 0 : i32
    %c0_i32_0 = arith.constant 0 : i32
    %c0_i32_1 = arith.constant 0 : i32
    return %c0_i32, %c0_i32_0 : i32, i32
  }
  func.func @transform_7(%arg0: i32) -> (i32, i32) {
    %c0_i32 = arith.constant 0 : i32
    %c0_i32_0 = arith.constant 0 : i32
    return %arg0, %c0_i32 : i32, i32
  }
}

</mosaic_0001>

<llo_original>
// kernel: simple_nn_forward.1
$region0: #{simple_nn_forward.1}
  #allocation0 [shape = 'u32[]', space=smem, size = 0x4, offset = 0x4, fixed_abs, tag = 'smem constant byte address 0x4 - core index']
  #allocation1 [shape = 'u32[144,128]{1,0:T(1,128)}', space=vmem, size = 0x12000, scoped, tag = 'internal scratch']
  %s0 = inlined_call_operand.vmem [shape: bf16[16,768], index: 0, kind: input, shape index: {}]
  %s1 = inlined_call_operand.hbm [shape: bf16[768,256], index: 1, kind: input, shape index: {}]
  %s2 = inlined_call_operand.vmem [shape: f32[1,256], index: 2, kind: input, shape index: {}]
  %s3 = inlined_call_operand.hbm [shape: bf16[256,128], index: 3, kind: input, shape index: {}]
  %s4 = inlined_call_operand.vmem [shape: f32[1,128], index: 4, kind: input, shape index: {}]
  %s5 = inlined_call_operand.vmem [shape: bf16[128,128], index: 5, kind: input, shape index: {}]
  %s6 = inlined_call_operand.vmem [shape: f32[1,128], index: 6, kind: input, shape index: {}]
  %s7 = inlined_call_operand.vmem [shape: bf16[16,128], index: 7, kind: output, shape index: {}]
  %s8 = sld [smem:[#allocation0]]
  $region46: #{simple_nn_forward.1} parent=0
    _
  %s10 = ssub.s32 1, %s8
  %s11 = scalar_select 0, %s10, %s8
  $region1: #{simple_nn_forward.1} parent=0
    #allocation2 [shape = 'u8[393216]{0}', space=vmem, size = 0x60000, scoped, tag = 'input window, operand 1, single buffered']
    #allocation3 [shape = 's32[1]{0}', space=sflag, size = 0x4, scoped, tag = 'scoped memory for simple_nn_forward.1']
    #allocation4 [shape = 'u8[65536]{0}', space=vmem, size = 0x10000, scoped, tag = 'input window, operand 3, single buffered']
    #allocation5 [shape = 's32[1]{0}', space=sflag, size = 0x4, scoped, tag = 'scoped memory for simple_nn_forward.1']
    %12 = vsyncpa [#allocation3], 0
    %13 = vsyncpa [#allocation5], 0
    // Predicated region
    $region2: #{simple_nn_forward.1} parent=1 // pred_check
      _
    $region3: #{simple_nn_forward.1} parent=1 // pred_check_branch
      %15 = sbr.rel (0) target = $region5
    $region4: #{simple_nn_forward.1} parent=1 // pred_region
      _
    $region5: #{simple_nn_forward.1} parent=1 // pred_fallthru
      _
    // Predicated region
    $region6: #{simple_nn_forward.1} parent=1 // pred_check
      _
    $region7: #{simple_nn_forward.1} parent=1 // pred_check_branch
      %17 = sbr.rel (0) target = $region9
    $region8: #{simple_nn_forward.1} parent=1 // pred_region
      %s19 = ssub.s32 12288, 12288
      %20 = vsyncadd [#allocation3], %s19
      %s21 = sshll.u32 [#allocation2], 4
      %s22 = int_to_ptr.vmem [resolvable:$true] %s21
      %27 = dma.hbm_to_vmem [thread:$0]  %s1, 12288, %s22, [#allocation3], 128, 128, 8
    $region9: #{simple_nn_forward.1} parent=1 // pred_fallthru
      _
    // Predicated region
    $region10: #{simple_nn_forward.1} parent=1 // pred_check
      _
    $region11: #{simple_nn_forward.1} parent=1 // pred_check_branch
      %29 = sbr.rel (0) target = $region13
    $region12: #{simple_nn_forward.1} parent=1 // pred_region
      _
    $region13: #{simple_nn_forward.1} parent=1 // pred_fallthru
      _
    // Predicated region
    $region14: #{simple_nn_forward.1} parent=1 // pred_check
      _
    $region15: #{simple_nn_forward.1} parent=1 // pred_check_branch
      %31 = sbr.rel (0) target = $region17
    $region16: #{simple_nn_forward.1} parent=1 // pred_region
      %s33 = ssub.s32 2048, 2048
      %34 = vsyncadd [#allocation5], %s33
      %s35 = sshll.u32 [#allocation4], 4
      %s36 = int_to_ptr.vmem [resolvable:$true] %s35
      %41 = dma.hbm_to_vmem [thread:$0]  %s3, 2048, %s36, [#allocation5], 64, 64, 4
    $region17: #{simple_nn_forward.1} parent=1 // pred_fallthru
      _
    // Predicated region
    $region18: #{simple_nn_forward.1} parent=1 // pred_check
      _
    $region19: #{simple_nn_forward.1} parent=1 // pred_check_branch
      %43 = sbr.rel (0) target = $region21
    $region20: #{simple_nn_forward.1} parent=1 // pred_region
      _
    $region21: #{simple_nn_forward.1} parent=1 // pred_fallthru
      _
    // Predicated region
    $region22: #{simple_nn_forward.1} parent=1 // pred_check
      _
    $region23: #{simple_nn_forward.1} parent=1 // pred_check_branch
      %45 = sbr.rel (0) target = $region25
    $region24: #{simple_nn_forward.1} parent=1 // pred_region
      _
    $region25: #{simple_nn_forward.1} parent=1 // pred_fallthru
      _
    // Predicated region
    $region26: #{simple_nn_forward.1} parent=1 // pred_check
      _
    $region27: #{simple_nn_forward.1} parent=1 // pred_check_branch
      %47 = sbr.rel (0) target = $region29
    $region28: #{simple_nn_forward.1} parent=1 // pred_region
      _
    $region29: #{simple_nn_forward.1} parent=1 // pred_fallthru
      _
    // Predicated region
    $region30: #{simple_nn_forward.1} parent=1 // pred_check
      _
    $region31: #{simple_nn_forward.1} parent=1 // pred_check_branch
      %49 = sbr.rel (0) target = $region33
    $region32: #{simple_nn_forward.1} parent=1 // pred_region
      %50 = dma.done [#allocation3], 12288
    $region33: #{simple_nn_forward.1} parent=1 // pred_fallthru
      _
    // Predicated region
    $region34: #{simple_nn_forward.1} parent=1 // pred_check
      _
    $region35: #{simple_nn_forward.1} parent=1 // pred_check_branch
      %52 = sbr.rel (0) target = $region37
    $region36: #{simple_nn_forward.1} parent=1 // pred_region
      %53 = dma.done [#allocation5], 2048
    $region37: #{simple_nn_forward.1} parent=1 // pred_fallthru
      _
    %v55 = vld [vmem:[%s0] sm:$0xff]
    %v56 = vld [vmem:[%s0 + $0x8] sm:$0xff]
    %v57 = vld [vmem:[%s0 + $0x10] sm:$0xff]
    %v58 = vld [vmem:[%s0 + $0x18] sm:$0xff]
    %v59 = vld [vmem:[%s0 + $0x20] sm:$0xff]
    %v60 = vld [vmem:[%s0 + $0x28] sm:$0xff]
    %v61 = vld [vmem:[#allocation2] sm:$0xff]
    %v62 = vld [vmem:[#allocation2 + $0x8] sm:$0xff]
    %v63 = vld [vmem:[#allocation2 + $0x10] sm:$0xff]
    %v64 = vld [vmem:[#allocation2 + $0x18] sm:$0xff]
    %v65 = vld [vmem:[#allocation2 + $0x20] sm:$0xff]
    %v66 = vld [vmem:[#allocation2 + $0x28] sm:$0xff]
    %v67 = vld [vmem:[#allocation2 + $0x30] sm:$0xff]
    %v68 = vld [vmem:[#allocation2 + $0x38] sm:$0xff]
    %v69 = vld [vmem:[#allocation2 + $0x40] sm:$0xff]
    %v70 = vld [vmem:[#allocation2 + $0x48] sm:$0xff]
    %v71 = vld [vmem:[#allocation2 + $0x50] sm:$0xff]
    %v72 = vld [vmem:[#allocation2 + $0x58] sm:$0xff]
    %v73 = vld [vmem:[#allocation2 + $0x60] sm:$0xff]
    %v74 = vld [vmem:[#allocation2 + $0x68] sm:$0xff]
    %v75 = vld [vmem:[#allocation2 + $0x70] sm:$0xff]
    %v76 = vld [vmem:[#allocation2 + $0x78] sm:$0xff]
    %v77 = vld [vmem:[#allocation2 + $0x80] sm:$0xff]
    %v78 = vld [vmem:[#allocation2 + $0x88] sm:$0xff]
    %v79 = vld [vmem:[#allocation2 + $0x90] sm:$0xff]
    %v80 = vld [vmem:[#allocation2 + $0x98] sm:$0xff]
    %v81 = vld [vmem:[#allocation2 + $0xa0] sm:$0xff]
    %v82 = vld [vmem:[#allocation2 + $0xa8] sm:$0xff]
    %v83 = vld [vmem:[#allocation2 + $0xb0] sm:$0xff]
    %v84 = vld [vmem:[#allocation2 + $0xb8] sm:$0xff]
    %v85 = vld [vmem:[#allocation2 + $0xc0] sm:$0xff]
    %v86 = vld [vmem:[#allocation2 + $0xc8] sm:$0xff]
    %v87 = vld [vmem:[#allocation2 + $0xd0] sm:$0xff]
    %v88 = vld [vmem:[#allocation2 + $0xd8] sm:$0xff]
    %v89 = vld [vmem:[#allocation2 + $0xe0] sm:$0xff]
    %v90 = vld [vmem:[#allocation2 + $0xe8] sm:$0xff]
    %v91 = vld [vmem:[#allocation2 + $0xf0] sm:$0xff]
    %v92 = vld [vmem:[#allocation2 + $0xf8] sm:$0xff]
    %v93 = vld [vmem:[#allocation2 + $0x100] sm:$0xff]
    %v94 = vld [vmem:[#allocation2 + $0x108] sm:$0xff]
    %v95 = vld [vmem:[#allocation2 + $0x110] sm:$0xff]
    %v96 = vld [vmem:[#allocation2 + $0x118] sm:$0xff]
    %v97 = vld [vmem:[#allocation2 + $0x120] sm:$0xff]
    %v98 = vld [vmem:[#allocation2 + $0x128] sm:$0xff]
    %v99 = vld [vmem:[#allocation2 + $0x130] sm:$0xff]
    %v100 = vld [vmem:[#allocation2 + $0x138] sm:$0xff]
    %v101 = vld [vmem:[#allocation2 + $0x140] sm:$0xff]
    %v102 = vld [vmem:[#allocation2 + $0x148] sm:$0xff]
    %v103 = vld [vmem:[#allocation2 + $0x150] sm:$0xff]
    %v104 = vld [vmem:[#allocation2 + $0x158] sm:$0xff]
    %v105 = vld [vmem:[#allocation2 + $0x160] sm:$0xff]
    %v106 = vld [vmem:[#allocation2 + $0x168] sm:$0xff]
    %v107 = vld [vmem:[#allocation2 + $0x170] sm:$0xff]
    %v108 = vld [vmem:[#allocation2 + $0x178] sm:$0xff]
    %v109 = vld [vmem:[#allocation2 + $0x180] sm:$0xff]
    %v110 = vld [vmem:[#allocation2 + $0x188] sm:$0xff]
    %v111 = vld [vmem:[#allocation2 + $0x190] sm:$0xff]
    %v112 = vld [vmem:[#allocation2 + $0x198] sm:$0xff]
    %v113 = vld [vmem:[#allocation2 + $0x1a0] sm:$0xff]
    %v114 = vld [vmem:[#allocation2 + $0x1a8] sm:$0xff]
    %v115 = vld [vmem:[#allocation2 + $0x1b0] sm:$0xff]
    %v116 = vld [vmem:[#allocation2 + $0x1b8] sm:$0xff]
    %v117 = vld [vmem:[#allocation2 + $0x1c0] sm:$0xff]
    %v118 = vld [vmem:[#allocation2 + $0x1c8] sm:$0xff]
    %v119 = vld [vmem:[#allocation2 + $0x1d0] sm:$0xff]
    %v120 = vld [vmem:[#allocation2 + $0x1d8] sm:$0xff]
    %v121 = vld [vmem:[#allocation2 + $0x1e0] sm:$0xff]
    %v122 = vld [vmem:[#allocation2 + $0x1e8] sm:$0xff]
    %v123 = vld [vmem:[#allocation2 + $0x1f0] sm:$0xff]
    %v124 = vld [vmem:[#allocation2 + $0x1f8] sm:$0xff]
    %v125 = vld [vmem:[#allocation2 + $0x200] sm:$0xff]
    %v126 = vld [vmem:[#allocation2 + $0x208] sm:$0xff]
    %v127 = vld [vmem:[#allocation2 + $0x210] sm:$0xff]
    %v128 = vld [vmem:[#allocation2 + $0x218] sm:$0xff]
    %v129 = vld [vmem:[#allocation2 + $0x220] sm:$0xff]
    %v130 = vld [vmem:[#allocation2 + $0x228] sm:$0xff]
    %v131 = vld [vmem:[#allocation2 + $0x230] sm:$0xff]
    %v132 = vld [vmem:[#allocation2 + $0x238] sm:$0xff]
    %v133 = vld [vmem:[#allocation2 + $0x240] sm:$0xff]
    %v134 = vld [vmem:[#allocation2 + $0x248] sm:$0xff]
    %v135 = vld [vmem:[#allocation2 + $0x250] sm:$0xff]
    %v136 = vld [vmem:[#allocation2 + $0x258] sm:$0xff]
    %v137 = vld [vmem:[#allocation2 + $0x260] sm:$0xff]
    %v138 = vld [vmem:[#allocation2 + $0x268] sm:$0xff]
    %v139 = vld [vmem:[#allocation2 + $0x270] sm:$0xff]
    %v140 = vld [vmem:[#allocation2 + $0x278] sm:$0xff]
    %v141 = vld [vmem:[#allocation2 + $0x280] sm:$0xff]
    %v142 = vld [vmem:[#allocation2 + $0x288] sm:$0xff]
    %v143 = vld [vmem:[#allocation2 + $0x290] sm:$0xff]
    %v144 = vld [vmem:[#allocation2 + $0x298] sm:$0xff]
    %v145 = vld [vmem:[#allocation2 + $0x2a0] sm:$0xff]
    %v146 = vld [vmem:[#allocation2 + $0x2a8] sm:$0xff]
    %v147 = vld [vmem:[#allocation2 + $0x2b0] sm:$0xff]
    %v148 = vld [vmem:[#allocation2 + $0x2b8] sm:$0xff]
    %v149 = vld [vmem:[#allocation2 + $0x2c0] sm:$0xff]
    %v150 = vld [vmem:[#allocation2 + $0x2c8] sm:$0xff]
    %v151 = vld [vmem:[#allocation2 + $0x2d0] sm:$0xff]
    %v152 = vld [vmem:[#allocation2 + $0x2d8] sm:$0xff]
    %v153 = vld [vmem:[#allocation2 + $0x2e0] sm:$0xff]
    %v154 = vld [vmem:[#allocation2 + $0x2e8] sm:$0xff]
    %v155 = vld [vmem:[#allocation2 + $0x2f0] sm:$0xff]
    %v156 = vld [vmem:[#allocation2 + $0x2f8] sm:$0xff]
    %v157 = vld [vmem:[%s2] sm:$0x3]
    %v159 = vlaneseq
    %v160 = vshrl.u32 %v159, 7
    %v161 = vsub.s32 0, %v160
    %v162 = vrot.slane %v157, %v161
    %v163 = vlaneseq
    %v164 = vshrl.u32 %v163, 7
    %v165 = vsub.s32 1, %v164
    %v166 = vrot.slane %v157, %v165
    %v175 = vunpack.c.l.b16 %v55
    %v176 = vunpack.c.h.b16 %v55
    %v177 = vunpack.c.l.b16 %v56
    %v178 = vunpack.c.h.b16 %v56
    %v179 = vunpack.c.l.b16 %v57
    %v180 = vunpack.c.h.b16 %v57
    %v181 = vunpack.c.l.b16 %v58
    %v182 = vunpack.c.h.b16 %v58
    %v183 = vunpack.c.l.b16 %v59
    %v184 = vunpack.c.h.b16 %v59
    %v185 = vunpack.c.l.b16 %v60
    %v186 = vunpack.c.h.b16 %v60
    %v187 = vpack.c.b16 %v181, %v175
    %v188 = vpack.c.b16 %v182, %v176
    %v189 = vpack.c.b16 %v183, %v177
    %v190 = vpack.c.b16 %v184, %v178
    %v191 = vpack.c.b16 %v185, %v179
    %v192 = vpack.c.b16 %v186, %v180
    %v295 = vunpack.c.l.b16 %v61
    %v296 = vunpack.c.h.b16 %v61
    %v297 = vunpack.c.l.b16 %v62
    %v298 = vunpack.c.h.b16 %v62
    %v299 = vunpack.c.l.b16 %v63
    %v300 = vunpack.c.h.b16 %v63
    %v301 = vunpack.c.l.b16 %v64
    %v302 = vunpack.c.h.b16 %v64
    %v303 = vunpack.c.l.b16 %v65
    %v304 = vunpack.c.h.b16 %v65
    %v305 = vunpack.c.l.b16 %v66
    %v306 = vunpack.c.h.b16 %v66
    %v307 = vunpack.c.l.b16 %v67
    %v308 = vunpack.c.h.b16 %v67
    %v309 = vunpack.c.l.b16 %v68
    %v310 = vunpack.c.h.b16 %v68
    %v311 = vunpack.c.l.b16 %v69
    %v312 = vunpack.c.h.b16 %v69
    %v313 = vunpack.c.l.b16 %v70
    %v314 = vunpack.c.h.b16 %v70
    %v315 = vunpack.c.l.b16 %v71
    %v316 = vunpack.c.h.b16 %v71
    %v317 = vunpack.c.l.b16 %v72
    %v318 = vunpack.c.h.b16 %v72
    %v319 = vunpack.c.l.b16 %v73
    %v320 = vunpack.c.h.b16 %v73
    %v321 = vunpack.c.l.b16 %v74
    %v322 = vunpack.c.h.b16 %v74
    %v323 = vunpack.c.l.b16 %v75
    %v324 = vunpack.c.h.b16 %v75
    %v325 = vunpack.c.l.b16 %v76
    %v326 = vunpack.c.h.b16 %v76
    %v327 = vunpack.c.l.b16 %v77
    %v328 = vunpack.c.h.b16 %v77
    %v329 = vunpack.c.l.b16 %v78
    %v330 = vunpack.c.h.b16 %v78
    %v331 = vunpack.c.l.b16 %v79
    %v332 = vunpack.c.h.b16 %v79
    %v333 = vunpack.c.l.b16 %v80
    %v334 = vunpack.c.h.b16 %v80
    %v335 = vunpack.c.l.b16 %v81
    %v336 = vunpack.c.h.b16 %v81
    %v337 = vunpack.c.l.b16 %v82
    %v338 = vunpack.c.h.b16 %v82
    %v339 = vunpack.c.l.b16 %v83
    %v340 = vunpack.c.h.b16 %v83
    %v341 = vunpack.c.l.b16 %v84
    %v342 = vunpack.c.h.b16 %v84
    %v343 = vunpack.c.l.b16 %v85
    %v344 = vunpack.c.h.b16 %v85
    %v345 = vunpack.c.l.b16 %v86
    %v346 = vunpack.c.h.b16 %v86
    %v347 = vunpack.c.l.b16 %v87
    %v348 = vunpack.c.h.b16 %v87
    %v349 = vunpack.c.l.b16 %v88
    %v350 = vunpack.c.h.b16 %v88
    %v351 = vunpack.c.l.b16 %v89
    %v352 = vunpack.c.h.b16 %v89
    %v353 = vunpack.c.l.b16 %v90
    %v354 = vunpack.c.h.b16 %v90
    %v355 = vunpack.c.l.b16 %v91
    %v356 = vunpack.c.h.b16 %v91
    %v357 = vunpack.c.l.b16 %v92
    %v358 = vunpack.c.h.b16 %v92
    %v359 = vunpack.c.l.b16 %v93
    %v360 = vunpack.c.h.b16 %v93
    %v361 = vunpack.c.l.b16 %v94
    %v362 = vunpack.c.h.b16 %v94
    %v363 = vunpack.c.l.b16 %v95
    %v364 = vunpack.c.h.b16 %v95
    %v365 = vunpack.c.l.b16 %v96
    %v366 = vunpack.c.h.b16 %v96
    %v367 = vunpack.c.l.b16 %v97
    %v368 = vunpack.c.h.b16 %v97
    %v369 = vunpack.c.l.b16 %v98
    %v370 = vunpack.c.h.b16 %v98
    %v371 = vunpack.c.l.b16 %v99
    %v372 = vunpack.c.h.b16 %v99
    %v373 = vunpack.c.l.b16 %v100
    %v374 = vunpack.c.h.b16 %v100
    %v375 = vunpack.c.l.b16 %v101
    %v376 = vunpack.c.h.b16 %v101
    %v377 = vunpack.c.l.b16 %v102
    %v378 = vunpack.c.h.b16 %v102
    %v379 = vunpack.c.l.b16 %v103
    %v380 = vunpack.c.h.b16 %v103
    %v381 = vunpack.c.l.b16 %v104
    %v382 = vunpack.c.h.b16 %v104
    %v383 = vunpack.c.l.b16 %v105
    %v384 = vunpack.c.h.b16 %v105
    %v385 = vunpack.c.l.b16 %v106
    %v386 = vunpack.c.h.b16 %v106
    %v387 = vunpack.c.l.b16 %v107
    %v388 = vunpack.c.h.b16 %v107
    %v389 = vunpack.c.l.b16 %v108
    %v390 = vunpack.c.h.b16 %v108
    %v391 = vunpack.c.l.b16 %v109
    %v392 = vunpack.c.h.b16 %v109
    %v393 = vunpack.c.l.b16 %v110
    %v394 = vunpack.c.h.b16 %v110
    %v395 = vunpack.c.l.b16 %v111
    %v396 = vunpack.c.h.b16 %v111
    %v397 = vunpack.c.l.b16 %v112
    %v398 = vunpack.c.h.b16 %v112
    %v399 = vunpack.c.l.b16 %v113
    %v400 = vunpack.c.h.b16 %v113
    %v401 = vunpack.c.l.b16 %v114
    %v402 = vunpack.c.h.b16 %v114
    %v403 = vunpack.c.l.b16 %v115
    %v404 = vunpack.c.h.b16 %v115
    %v405 = vunpack.c.l.b16 %v116
    %v406 = vunpack.c.h.b16 %v116
    %v407 = vunpack.c.l.b16 %v117
    %v408 = vunpack.c.h.b16 %v117
    %v409 = vunpack.c.l.b16 %v118
    %v410 = vunpack.c.h.b16 %v118
    %v411 = vunpack.c.l.b16 %v119
    %v412 = vunpack.c.h.b16 %v119
    %v413 = vunpack.c.l.b16 %v120
    %v414 = vunpack.c.h.b16 %v120
    %v415 = vunpack.c.l.b16 %v121
    %v416 = vunpack.c.h.b16 %v121
    %v417 = vunpack.c.l.b16 %v122
    %v418 = vunpack.c.h.b16 %v122
    %v419 = vunpack.c.l.b16 %v123
    %v420 = vunpack.c.h.b16 %v123
    %v421 = vunpack.c.l.b16 %v124
    %v422 = vunpack.c.h.b16 %v124
    %v423 = vunpack.c.l.b16 %v125
    %v424 = vunpack.c.h.b16 %v125
    %v425 = vunpack.c.l.b16 %v126
    %v426 = vunpack.c.h.b16 %v126
    %v427 = vunpack.c.l.b16 %v127
    %v428 = vunpack.c.h.b16 %v127
    %v429 = vunpack.c.l.b16 %v128
    %v430 = vunpack.c.h.b16 %v128
    %v431 = vunpack.c.l.b16 %v129
    %v432 = vunpack.c.h.b16 %v129
    %v433 = vunpack.c.l.b16 %v130
    %v434 = vunpack.c.h.b16 %v130
    %v435 = vunpack.c.l.b16 %v131
    %v436 = vunpack.c.h.b16 %v131
    %v437 = vunpack.c.l.b16 %v132
    %v438 = vunpack.c.h.b16 %v132
    %v439 = vunpack.c.l.b16 %v133
    %v440 = vunpack.c.h.b16 %v133
    %v441 = vunpack.c.l.b16 %v134
    %v442 = vunpack.c.h.b16 %v134
    %v443 = vunpack.c.l.b16 %v135
    %v444 = vunpack.c.h.b16 %v135
    %v445 = vunpack.c.l.b16 %v136
    %v446 = vunpack.c.h.b16 %v136
    %v447 = vunpack.c.l.b16 %v137
    %v448 = vunpack.c.h.b16 %v137
    %v449 = vunpack.c.l.b16 %v138
    %v450 = vunpack.c.h.b16 %v138
    %v451 = vunpack.c.l.b16 %v139
    %v452 = vunpack.c.h.b16 %v139
    %v453 = vunpack.c.l.b16 %v140
    %v454 = vunpack.c.h.b16 %v140
    %v455 = vunpack.c.l.b16 %v141
    %v456 = vunpack.c.h.b16 %v141
    %v457 = vunpack.c.l.b16 %v142
    %v458 = vunpack.c.h.b16 %v142
    %v459 = vunpack.c.l.b16 %v143
    %v460 = vunpack.c.h.b16 %v143
    %v461 = vunpack.c.l.b16 %v144
    %v462 = vunpack.c.h.b16 %v144
    %v463 = vunpack.c.l.b16 %v145
    %v464 = vunpack.c.h.b16 %v145
    %v465 = vunpack.c.l.b16 %v146
    %v466 = vunpack.c.h.b16 %v146
    %v467 = vunpack.c.l.b16 %v147
    %v468 = vunpack.c.h.b16 %v147
    %v469 = vunpack.c.l.b16 %v148
    %v470 = vunpack.c.h.b16 %v148
    %v471 = vunpack.c.l.b16 %v149
    %v472 = vunpack.c.h.b16 %v149
    %v473 = vunpack.c.l.b16 %v150
    %v474 = vunpack.c.h.b16 %v150
    %v475 = vunpack.c.l.b16 %v151
    %v476 = vunpack.c.h.b16 %v151
    %v477 = vunpack.c.l.b16 %v152
    %v478 = vunpack.c.h.b16 %v152
    %v479 = vunpack.c.l.b16 %v153
    %v480 = vunpack.c.h.b16 %v153
    %v481 = vunpack.c.l.b16 %v154
    %v482 = vunpack.c.h.b16 %v154
    %v483 = vunpack.c.l.b16 %v155
    %v484 = vunpack.c.h.b16 %v155
    %v485 = vunpack.c.l.b16 %v156
    %v486 = vunpack.c.h.b16 %v156
    %v487 = vpack.c.b16 %v297, %v295
    %v488 = vpack.c.b16 %v298, %v296
    %v489 = vpack.c.b16 %v301, %v299
    %v490 = vpack.c.b16 %v302, %v300
    %v491 = vpack.c.b16 %v305, %v303
    %v492 = vpack.c.b16 %v306, %v304
    %v493 = vpack.c.b16 %v309, %v307
    %v494 = vpack.c.b16 %v310, %v308
    %v495 = vpack.c.b16 %v313, %v311
    %v496 = vpack.c.b16 %v314, %v312
    %v497 = vpack.c.b16 %v317, %v315
    %v498 = vpack.c.b16 %v318, %v316
    %v499 = vpack.c.b16 %v321, %v319
    %v500 = vpack.c.b16 %v322, %v320
    %v501 = vpack.c.b16 %v325, %v323
    %v502 = vpack.c.b16 %v326, %v324
    %v503 = vpack.c.b16 %v329, %v327
    %v504 = vpack.c.b16 %v330, %v328
    %v505 = vpack.c.b16 %v333, %v331
    %v506 = vpack.c.b16 %v334, %v332
    %v507 = vpack.c.b16 %v337, %v335
    %v508 = vpack.c.b16 %v338, %v336
    %v509 = vpack.c.b16 %v341, %v339
    %v510 = vpack.c.b16 %v342, %v340
    %v511 = vpack.c.b16 %v345, %v343
    %v512 = vpack.c.b16 %v346, %v344
    %v513 = vpack.c.b16 %v349, %v347
    %v514 = vpack.c.b16 %v350, %v348
    %v515 = vpack.c.b16 %v353, %v351
    %v516 = vpack.c.b16 %v354, %v352
    %v517 = vpack.c.b16 %v357, %v355
    %v518 = vpack.c.b16 %v358, %v356
    %v519 = vpack.c.b16 %v361, %v359
    %v520 = vpack.c.b16 %v362, %v360
    %v521 = vpack.c.b16 %v365, %v363
    %v522 = vpack.c.b16 %v366, %v364
    %v523 = vpack.c.b16 %v369, %v367
    %v524 = vpack.c.b16 %v370, %v368
    %v525 = vpack.c.b16 %v373, %v371
    %v526 = vpack.c.b16 %v374, %v372
    %v527 = vpack.c.b16 %v377, %v375
    %v528 = vpack.c.b16 %v378, %v376
    %v529 = vpack.c.b16 %v381, %v379
    %v530 = vpack.c.b16 %v382, %v380
    %v531 = vpack.c.b16 %v385, %v383
    %v532 = vpack.c.b16 %v386, %v384
    %v533 = vpack.c.b16 %v389, %v387
    %v534 = vpack.c.b16 %v390, %v388
    %v535 = vpack.c.b16 %v393, %v391
    %v536 = vpack.c.b16 %v394, %v392
    %v537 = vpack.c.b16 %v397, %v395
    %v538 = vpack.c.b16 %v398, %v396
    %v539 = vpack.c.b16 %v401, %v399
    %v540 = vpack.c.b16 %v402, %v400
    %v541 = vpack.c.b16 %v405, %v403
    %v542 = vpack.c.b16 %v406, %v404
    %v543 = vpack.c.b16 %v409, %v407
    %v544 = vpack.c.b16 %v410, %v408
    %v545 = vpack.c.b16 %v413, %v411
    %v546 = vpack.c.b16 %v414, %v412
    %v547 = vpack.c.b16 %v417, %v415
    %v548 = vpack.c.b16 %v418, %v416
    %v549 = vpack.c.b16 %v421, %v419
    %v550 = vpack.c.b16 %v422, %v420
    %v551 = vpack.c.b16 %v425, %v423
    %v552 = vpack.c.b16 %v426, %v424
    %v553 = vpack.c.b16 %v429, %v427
    %v554 = vpack.c.b16 %v430, %v428
    %v555 = vpack.c.b16 %v433, %v431
    %v556 = vpack.c.b16 %v434, %v432
    %v557 = vpack.c.b16 %v437, %v435
    %v558 = vpack.c.b16 %v438, %v436
    %v559 = vpack.c.b16 %v441, %v439
    %v560 = vpack.c.b16 %v442, %v440
    %v561 = vpack.c.b16 %v445, %v443
    %v562 = vpack.c.b16 %v446, %v444
    %v563 = vpack.c.b16 %v449, %v447
    %v564 = vpack.c.b16 %v450, %v448
    %v565 = vpack.c.b16 %v453, %v451
    %v566 = vpack.c.b16 %v454, %v452
    %v567 = vpack.c.b16 %v457, %v455
    %v568 = vpack.c.b16 %v458, %v456
    %v569 = vpack.c.b16 %v461, %v459
    %v570 = vpack.c.b16 %v462, %v460
    %v571 = vpack.c.b16 %v465, %v463
    %v572 = vpack.c.b16 %v466, %v464
    %v573 = vpack.c.b16 %v469, %v467
    %v574 = vpack.c.b16 %v470, %v468
    %v575 = vpack.c.b16 %v473, %v471
    %v576 = vpack.c.b16 %v474, %v472
    %v577 = vpack.c.b16 %v477, %v475
    %v578 = vpack.c.b16 %v478, %v476
    %v579 = vpack.c.b16 %v481, %v479
    %v580 = vpack.c.b16 %v482, %v480
    %v581 = vpack.c.b16 %v485, %v483
    %v582 = vpack.c.b16 %v486, %v484
    %679 = vmatprep.subr.bf16.mxu0 %v502
    %680 = vmatpush1.bf16.msra.mxu0 %v501
    %681 = vmatprep.subr.bf16.mxu0 %v500
    %682 = vmatpush1.bf16.msra.mxu0 %v499
    %683 = vmatprep.subr.bf16.mxu0 %v498
    %684 = vmatpush1.bf16.msra.mxu0 %v497
    %685 = vmatprep.subr.bf16.mxu0 %v496
    %686 = vmatpush1.bf16.msra.mxu0 %v495
    %687 = vmatprep.subr.bf16.mxu0 %v494
    %688 = vmatpush1.bf16.msra.mxu0 %v493
    %689 = vmatprep.subr.bf16.mxu0 %v492
    %690 = vmatpush1.bf16.msra.mxu0 %v491
    %691 = vmatprep.subr.bf16.mxu0 %v490
    %692 = vmatpush1.bf16.msra.mxu0 %v489
    %693 = vmatprep.subr.bf16.mxu0 %v488
    %694 = vmatpush1.bf16.msra.mxu0 %v487
    %695 = vmatprep.subr.bf16.mxu0 %v518
    %696 = vmatpush2.bf16.msra.mxu0 %v517
    %697 = vmatprep.subr.bf16.mxu0 %v516
    %698 = vmatpush2.bf16.msra.mxu0 %v515
    %699 = vmatprep.subr.bf16.mxu0 %v514
    %700 = vmatpush2.bf16.msra.mxu0 %v513
    %701 = vmatprep.subr.bf16.mxu0 %v512
    %702 = vmatpush2.bf16.msra.mxu0 %v511
    %703 = vmatprep.subr.bf16.mxu0 %v510
    %704 = vmatpush2.bf16.msra.mxu0 %v509
    %705 = vmatprep.subr.bf16.mxu0 %v508
    %706 = vmatpush2.bf16.msra.mxu0 %v507
    %707 = vmatprep.subr.bf16.mxu0 %v506
    %708 = vmatpush2.bf16.msra.mxu0 %v505
    %709 = vmatprep.subr.bf16.mxu0 %v504
    %710 = vmatpush2.bf16.msra.mxu0 %v503
    %711 = vmatprep.mubr.bf16.mxu0 %v188
    %712 = vmatmul.mubr.bf16.gmra.mxu0 %v187
    %v713 = vpop.f32.mrf.mxu0
    %v714 = vadd.f32 %v162, %v713
    %v715 = vpop.f32.mrf.mxu0
    %v716 = vadd.f32 %v166, %v715
    %v717 = vpop.f32.mrf.mxu0
    %v718 = vadd.f32 %v162, %v717
    %v719 = vpop.f32.mrf.mxu0
    %v720 = vadd.f32 %v166, %v719
    %721 = vdwg.mxu0
    %722 = vmatprep.subr.bf16.mxu0 %v534
    %723 = vmatpush1.bf16.msra.mxu0 %v533
    %724 = vmatprep.subr.bf16.mxu0 %v532
    %725 = vmatpush1.bf16.msra.mxu0 %v531
    %726 = vmatprep.subr.bf16.mxu0 %v530
    %727 = vmatpush1.bf16.msra.mxu0 %v529
    %728 = vmatprep.subr.bf16.mxu0 %v528
    %729 = vmatpush1.bf16.msra.mxu0 %v527
    %730 = vmatprep.subr.bf16.mxu0 %v526
    %731 = vmatpush1.bf16.msra.mxu0 %v525
    %732 = vmatprep.subr.bf16.mxu0 %v524
    %733 = vmatpush1.bf16.msra.mxu0 %v523
    %734 = vmatprep.subr.bf16.mxu0 %v522
    %735 = vmatpush1.bf16.msra.mxu0 %v521
    %736 = vmatprep.subr.bf16.mxu0 %v520
    %737 = vmatpush1.bf16.msra.mxu0 %v519
    %738 = vmatprep.subr.bf16.mxu0 %v550
    %739 = vmatpush2.bf16.msra.mxu0 %v549
    %740 = vmatprep.subr.bf16.mxu0 %v548
    %741 = vmatpush2.bf16.msra.mxu0 %v547
    %742 = vmatprep.subr.bf16.mxu0 %v546
    %743 = vmatpush2.bf16.msra.mxu0 %v545
    %744 = vmatprep.subr.bf16.mxu0 %v544
    %745 = vmatpush2.bf16.msra.mxu0 %v543
    %746 = vmatprep.subr.bf16.mxu0 %v542
    %747 = vmatpush2.bf16.msra.mxu0 %v541
    %748 = vmatprep.subr.bf16.mxu0 %v540
    %749 = vmatpush2.bf16.msra.mxu0 %v539
    %750 = vmatprep.subr.bf16.mxu0 %v538
    %751 = vmatpush2.bf16.msra.mxu0 %v537
    %752 = vmatprep.subr.bf16.mxu0 %v536
    %753 = vmatpush2.bf16.msra.mxu0 %v535
    %754 = vmatprep.mubr.bf16.mxu0 %v190
    %755 = vmatmul.mubr.bf16.gmra.mxu0 %v189
    %v756 = vpop.f32.mrf.mxu0
    %v757 = vadd.f32 %v714, %v756
    %v758 = vpop.f32.mrf.mxu0
    %v759 = vadd.f32 %v716, %v758
    %v760 = vpop.f32.mrf.mxu0
    %v761 = vadd.f32 %v718, %v760
    %v762 = vpop.f32.mrf.mxu0
    %v763 = vadd.f32 %v720, %v762
    %764 = vdwg.mxu0
    %765 = vmatprep.subr.bf16.mxu0 %v566
    %766 = vmatpush1.bf16.msra.mxu0 %v565
    %767 = vmatprep.subr.bf16.mxu0 %v564
    %768 = vmatpush1.bf16.msra.mxu0 %v563
    %769 = vmatprep.subr.bf16.mxu0 %v562
    %770 = vmatpush1.bf16.msra.mxu0 %v561
    %771 = vmatprep.subr.bf16.mxu0 %v560
    %772 = vmatpush1.bf16.msra.mxu0 %v559
    %773 = vmatprep.subr.bf16.mxu0 %v558
    %774 = vmatpush1.bf16.msra.mxu0 %v557
    %775 = vmatprep.subr.bf16.mxu0 %v556
    %776 = vmatpush1.bf16.msra.mxu0 %v555
    %777 = vmatprep.subr.bf16.mxu0 %v554
    %778 = vmatpush1.bf16.msra.mxu0 %v553
    %779 = vmatprep.subr.bf16.mxu0 %v552
    %780 = vmatpush1.bf16.msra.mxu0 %v551
    %781 = vmatprep.subr.bf16.mxu0 %v582
    %782 = vmatpush2.bf16.msra.mxu0 %v581
    %783 = vmatprep.subr.bf16.mxu0 %v580
    %784 = vmatpush2.bf16.msra.mxu0 %v579
    %785 = vmatprep.subr.bf16.mxu0 %v578
    %786 = vmatpush2.bf16.msra.mxu0 %v577
    %787 = vmatprep.subr.bf16.mxu0 %v576
    %788 = vmatpush2.bf16.msra.mxu0 %v575
    %789 = vmatprep.subr.bf16.mxu0 %v574
    %790 = vmatpush2.bf16.msra.mxu0 %v573
    %791 = vmatprep.subr.bf16.mxu0 %v572
    %792 = vmatpush2.bf16.msra.mxu0 %v571
    %793 = vmatprep.subr.bf16.mxu0 %v570
    %794 = vmatpush2.bf16.msra.mxu0 %v569
    %795 = vmatprep.subr.bf16.mxu0 %v568
    %796 = vmatpush2.bf16.msra.mxu0 %v567
    %797 = vmatprep.mubr.bf16.mxu0 %v192
    %798 = vmatmul.mubr.bf16.gmra.mxu0 %v191
    %v799 = vpop.f32.mrf.mxu0
    %v800 = vadd.f32 %v757, %v799
    %v801 = vpop.f32.mrf.mxu0
    %v802 = vadd.f32 %v759, %v801
    %v803 = vpop.f32.mrf.mxu0
    %v804 = vadd.f32 %v761, %v803
    %v805 = vpop.f32.mrf.mxu0
    %v806 = vadd.f32 %v763, %v805
    %807 = vdwg.mxu0
    %v808 = vmax.f32 %v800, 0.0
    %v809 = vmax.f32 %v802, 0.0
    %v810 = vmax.f32 %v804, 0.0
    %v811 = vmax.f32 %v806, 0.0
    %v812 = vpack.c.bf16 %v810, %v808
    %v813 = vpack.c.bf16 %v811, %v809
    %v814 = vld [vmem:[#allocation4] sm:$0xf]
    %v815 = vld [vmem:[#allocation4 + $0x4] sm:$0xf]
    %v816 = vld [vmem:[#allocation4 + $0x8] sm:$0xf]
    %v817 = vld [vmem:[#allocation4 + $0xc] sm:$0xf]
    %v818 = vld [vmem:[#allocation4 + $0x10] sm:$0xf]
    %v819 = vld [vmem:[#allocation4 + $0x14] sm:$0xf]
    %v820 = vld [vmem:[#allocation4 + $0x18] sm:$0xf]
    %v821 = vld [vmem:[#allocation4 + $0x1c] sm:$0xf]
    %v822 = vld [vmem:[#allocation4 + $0x20] sm:$0xf]
    %v823 = vld [vmem:[#allocation4 + $0x24] sm:$0xf]
    %v824 = vld [vmem:[#allocation4 + $0x28] sm:$0xf]
    %v825 = vld [vmem:[#allocation4 + $0x2c] sm:$0xf]
    %v826 = vld [vmem:[#allocation4 + $0x30] sm:$0xf]
    %v827 = vld [vmem:[#allocation4 + $0x34] sm:$0xf]
    %v828 = vld [vmem:[#allocation4 + $0x38] sm:$0xf]
    %v829 = vld [vmem:[#allocation4 + $0x3c] sm:$0xf]
    %v830 = vld [vmem:[#allocation4 + $0x40] sm:$0xf]
    %v831 = vld [vmem:[#allocation4 + $0x44] sm:$0xf]
    %v832 = vld [vmem:[#allocation4 + $0x48] sm:$0xf]
    %v833 = vld [vmem:[#allocation4 + $0x4c] sm:$0xf]
    %v834 = vld [vmem:[#allocation4 + $0x50] sm:$0xf]
    %v835 = vld [vmem:[#allocation4 + $0x54] sm:$0xf]
    %v836 = vld [vmem:[#allocation4 + $0x58] sm:$0xf]
    %v837 = vld [vmem:[#allocation4 + $0x5c] sm:$0xf]
    %v838 = vld [vmem:[#allocation4 + $0x60] sm:$0xf]
    %v839 = vld [vmem:[#allocation4 + $0x64] sm:$0xf]
    %v840 = vld [vmem:[#allocation4 + $0x68] sm:$0xf]
    %v841 = vld [vmem:[#allocation4 + $0x6c] sm:$0xf]
    %v842 = vld [vmem:[#allocation4 + $0x70] sm:$0xf]
    %v843 = vld [vmem:[#allocation4 + $0x74] sm:$0xf]
    %v844 = vld [vmem:[#allocation4 + $0x78] sm:$0xf]
    %v845 = vld [vmem:[#allocation4 + $0x7c] sm:$0xf]
    %v846 = vld [vmem:[%s4] sm:$0x1]
    %v848 = vlaneseq
    %v849 = vshrl.u32 %v848, 7
    %v850 = vsub.s32 0, %v849
    %v851 = vrot.slane %v846, %v850
    %v885 = vunpack.c.l.b16 %v814
    %v886 = vunpack.c.l.b16 %v815
    %v887 = vunpack.c.l.b16 %v816
    %v888 = vunpack.c.l.b16 %v817
    %v889 = vunpack.c.l.b16 %v818
    %v890 = vunpack.c.l.b16 %v819
    %v891 = vunpack.c.l.b16 %v820
    %v892 = vunpack.c.l.b16 %v821
    %v893 = vunpack.c.l.b16 %v822
    %v894 = vunpack.c.l.b16 %v823
    %v895 = vunpack.c.l.b16 %v824
    %v896 = vunpack.c.l.b16 %v825
    %v897 = vunpack.c.l.b16 %v826
    %v898 = vunpack.c.l.b16 %v827
    %v899 = vunpack.c.l.b16 %v828
    %v900 = vunpack.c.l.b16 %v829
    %v901 = vunpack.c.l.b16 %v830
    %v902 = vunpack.c.l.b16 %v831
    %v903 = vunpack.c.l.b16 %v832
    %v904 = vunpack.c.l.b16 %v833
    %v905 = vunpack.c.l.b16 %v834
    %v906 = vunpack.c.l.b16 %v835
    %v907 = vunpack.c.l.b16 %v836
    %v908 = vunpack.c.l.b16 %v837
    %v909 = vunpack.c.l.b16 %v838
    %v910 = vunpack.c.l.b16 %v839
    %v911 = vunpack.c.l.b16 %v840
    %v912 = vunpack.c.l.b16 %v841
    %v913 = vunpack.c.l.b16 %v842
    %v914 = vunpack.c.l.b16 %v843
    %v915 = vunpack.c.l.b16 %v844
    %v916 = vunpack.c.l.b16 %v845
    %v917 = vpack.c.b16 %v886, %v885
    %v918 = vpack.c.b16 %v888, %v887
    %v919 = vpack.c.b16 %v890, %v889
    %v920 = vpack.c.b16 %v892, %v891
    %v921 = vpack.c.b16 %v894, %v893
    %v922 = vpack.c.b16 %v896, %v895
    %v923 = vpack.c.b16 %v898, %v897
    %v924 = vpack.c.b16 %v900, %v899
    %v925 = vpack.c.b16 %v902, %v901
    %v926 = vpack.c.b16 %v904, %v903
    %v927 = vpack.c.b16 %v906, %v905
    %v928 = vpack.c.b16 %v908, %v907
    %v929 = vpack.c.b16 %v910, %v909
    %v930 = vpack.c.b16 %v912, %v911
    %v931 = vpack.c.b16 %v914, %v913
    %v932 = vpack.c.b16 %v916, %v915
    %949 = vmatprep.subr.bf16.mxu0 0
    %950 = vmatpush1.bf16.msra.mxu0 %v924
    %951 = vmatprep.subr.bf16.mxu0 0
    %952 = vmatpush1.bf16.msra.mxu0 %v923
    %953 = vmatprep.subr.bf16.mxu0 0
    %954 = vmatpush1.bf16.msra.mxu0 %v922
    %955 = vmatprep.subr.bf16.mxu0 0
    %956 = vmatpush1.bf16.msra.mxu0 %v921
    %957 = vmatprep.subr.bf16.mxu0 0
    %958 = vmatpush1.bf16.msra.mxu0 %v920
    %959 = vmatprep.subr.bf16.mxu0 0
    %960 = vmatpush1.bf16.msra.mxu0 %v919
    %961 = vmatprep.subr.bf16.mxu0 0
    %962 = vmatpush1.bf16.msra.mxu0 %v918
    %963 = vmatprep.subr.bf16.mxu0 0
    %964 = vmatpush1.bf16.msra.mxu0 %v917
    %965 = vmatprep.subr.bf16.mxu0 0
    %966 = vmatpush2.bf16.msra.mxu0 %v932
    %967 = vmatprep.subr.bf16.mxu0 0
    %968 = vmatpush2.bf16.msra.mxu0 %v931
    %969 = vmatprep.subr.bf16.mxu0 0
    %970 = vmatpush2.bf16.msra.mxu0 %v930
    %971 = vmatprep.subr.bf16.mxu0 0
    %972 = vmatpush2.bf16.msra.mxu0 %v929
    %973 = vmatprep.subr.bf16.mxu0 0
    %974 = vmatpush2.bf16.msra.mxu0 %v928
    %975 = vmatprep.subr.bf16.mxu0 0
    %976 = vmatpush2.bf16.msra.mxu0 %v927
    %977 = vmatprep.subr.bf16.mxu0 0
    %978 = vmatpush2.bf16.msra.mxu0 %v926
    %979 = vmatprep.subr.bf16.mxu0 0
    %980 = vmatpush2.bf16.msra.mxu0 %v925
    %981 = vmatprep.mubr.bf16.mxu0 %v813
    %982 = vmatmul.mubr.bf16.gmra.mxu0 %v812
    %v983 = vpop.f32.mrf.mxu0
    %v984 = vadd.f32 %v851, %v983
    %v985 = vpop.f32.mrf.mxu0
    %v986 = vpop.f32.mrf.mxu0
    %v987 = vadd.f32 %v851, %v986
    %v988 = vpop.f32.mrf.mxu0
    %989 = vdwg.mxu0
    %v990 = vmax.f32 %v984, 0.0
    %v991 = vmax.f32 %v987, 0.0
    %v992 = vpack.c.bf16 %v991, %v990
    %v993 = vld [vmem:[%s5] sm:$0xf]
    %v994 = vld [vmem:[%s5 + $0x4] sm:$0xf]
    %v995 = vld [vmem:[%s5 + $0x8] sm:$0xf]
    %v996 = vld [vmem:[%s5 + $0xc] sm:$0xf]
    %v997 = vld [vmem:[%s5 + $0x10] sm:$0xf]
    %v998 = vld [vmem:[%s5 + $0x14] sm:$0xf]
    %v999 = vld [vmem:[%s5 + $0x18] sm:$0xf]
    %v1000 = vld [vmem:[%s5 + $0x1c] sm:$0xf]
    %v1001 = vld [vmem:[%s5 + $0x20] sm:$0xf]
    %v1002 = vld [vmem:[%s5 + $0x24] sm:$0xf]
    %v1003 = vld [vmem:[%s5 + $0x28] sm:$0xf]
    %v1004 = vld [vmem:[%s5 + $0x2c] sm:$0xf]
    %v1005 = vld [vmem:[%s5 + $0x30] sm:$0xf]
    %v1006 = vld [vmem:[%s5 + $0x34] sm:$0xf]
    %v1007 = vld [vmem:[%s5 + $0x38] sm:$0xf]
    %v1008 = vld [vmem:[%s5 + $0x3c] sm:$0xf]
    %v1009 = vld [vmem:[%s6] sm:$0x1]
    %v1011 = vlaneseq
    %v1012 = vshrl.u32 %v1011, 7
    %v1013 = vsub.s32 0, %v1012
    %v1014 = vrot.slane %v1009, %v1013
    %v1032 = vunpack.c.l.b16 %v993
    %v1033 = vunpack.c.l.b16 %v994
    %v1034 = vunpack.c.l.b16 %v995
    %v1035 = vunpack.c.l.b16 %v996
    %v1036 = vunpack.c.l.b16 %v997
    %v1037 = vunpack.c.l.b16 %v998
    %v1038 = vunpack.c.l.b16 %v999
    %v1039 = vunpack.c.l.b16 %v1000
    %v1040 = vunpack.c.l.b16 %v1001
    %v1041 = vunpack.c.l.b16 %v1002
    %v1042 = vunpack.c.l.b16 %v1003
    %v1043 = vunpack.c.l.b16 %v1004
    %v1044 = vunpack.c.l.b16 %v1005
    %v1045 = vunpack.c.l.b16 %v1006
    %v1046 = vunpack.c.l.b16 %v1007
    %v1047 = vunpack.c.l.b16 %v1008
    %v1048 = vpack.c.b16 %v1033, %v1032
    %v1049 = vpack.c.b16 %v1035, %v1034
    %v1050 = vpack.c.b16 %v1037, %v1036
    %v1051 = vpack.c.b16 %v1039, %v1038
    %v1052 = vpack.c.b16 %v1041, %v1040
    %v1053 = vpack.c.b16 %v1043, %v1042
    %v1054 = vpack.c.b16 %v1045, %v1044
    %v1055 = vpack.c.b16 %v1047, %v1046
    %1064 = vmatprep.subr.bf16.mxu0 0
    %1065 = vmatpush1.bf16.msra.mxu0 %v1055
    %1066 = vmatprep.subr.bf16.mxu0 0
    %1067 = vmatpush1.bf16.msra.mxu0 %v1054
    %1068 = vmatprep.subr.bf16.mxu0 0
    %1069 = vmatpush1.bf16.msra.mxu0 %v1053
    %1070 = vmatprep.subr.bf16.mxu0 0
    %1071 = vmatpush1.bf16.msra.mxu0 %v1052
    %1072 = vmatprep.subr.bf16.mxu0 0
    %1073 = vmatpush1.bf16.msra.mxu0 %v1051
    %1074 = vmatprep.subr.bf16.mxu0 0
    %1075 = vmatpush1.bf16.msra.mxu0 %v1050
    %1076 = vmatprep.subr.bf16.mxu0 0
    %1077 = vmatpush1.bf16.msra.mxu0 %v1049
    %1078 = vmatprep.subr.bf16.mxu0 0
    %1079 = vmatpush1.bf16.msra.mxu0 %v1048
    %1080 = vmatprep.subr.bf16.mxu0 0
    %1081 = vmatpush2.bf16.msra.mxu0 0
    %1082 = vmatprep.subr.bf16.mxu0 0
    %1083 = vmatpush2.bf16.msra.mxu0 0
    %1084 = vmatprep.subr.bf16.mxu0 0
    %1085 = vmatpush2.bf16.msra.mxu0 0
    %1086 = vmatprep.subr.bf16.mxu0 0
    %1087 = vmatpush2.bf16.msra.mxu0 0
    %1088 = vmatprep.subr.bf16.mxu0 0
    %1089 = vmatpush2.bf16.msra.mxu0 0
    %1090 = vmatprep.subr.bf16.mxu0 0
    %1091 = vmatpush2.bf16.msra.mxu0 0
    %1092 = vmatprep.subr.bf16.mxu0 0
    %1093 = vmatpush2.bf16.msra.mxu0 0
    %1094 = vmatprep.subr.bf16.mxu0 0
    %1095 = vmatpush2.bf16.msra.mxu0 0
    %1096 = vmatprep.mubr.bf16.mxu0 0
    %1097 = vmatmul.mubr.bf16.gmra.mxu0 %v992
    %v1098 = vpop.f32.mrf.mxu0
    %v1099 = vadd.f32 %v1014, %v1098
    %v1100 = vpop.f32.mrf.mxu0
    %v1101 = vpop.f32.mrf.mxu0
    %v1102 = vadd.f32 %v1014, %v1101
    %v1103 = vpop.f32.mrf.mxu0
    %1104 = vdwg.mxu0
    %v1105 = vpack.c.bf16 %v1102, %v1099
    %v1107 = vunpack.c.l.b16 %v1105
    %v1108 = vunpack.c.h.b16 %v1105
    %v1109 = vpack.c.b16 %v1107, %v1107
    %v1110 = vpack.c.b16 %v1108, %v1108
    %1113 = vst [vmem:[%s7] sm:$0xf] %v1109
    %1114 = vst [vmem:[%s7 + $0x4] sm:$0xf] %v1110
    // Predicated region
    $region38: #{simple_nn_forward.1} parent=1 // pred_check
      _
    $region39: #{simple_nn_forward.1} parent=1 // pred_check_branch
      %1116 = sbr.rel (0) target = $region41
    $region40: #{simple_nn_forward.1} parent=1 // pred_region
      _
    $region41: #{simple_nn_forward.1} parent=1 // pred_fallthru
      _
    // Predicated region
    $region42: #{simple_nn_forward.1} parent=1 // pred_check
      _
    $region43: #{simple_nn_forward.1} parent=1 // pred_check_branch
      %1118 = sbr.rel (0) target = $region45
    $region44: #{simple_nn_forward.1} parent=1 // pred_region
      _
    $region45: #{simple_nn_forward.1} parent=1 // pred_fallthru
      _
    %1119 = vsyncpa [#allocation3], 1
    %1120 = vsyncpa [#allocation5], 1

</llo_original>
